<compile_context>
chip_gen: v5e
topology: v5e:2x2
jax: 0.10.0
libtpu: 0.0.40
codegen_flags: <defaults>
</compile_context>

<pallas_src>
import functools

import jax
import jax.numpy as jnp
from jax.experimental import pallas as pl
from jax.experimental.pallas import tpu as pltpu

EPS = 1e-6


def _round_up(a: int, m: int) -> int:
    return (a + m - 1) // m * m


def _vmem_capacity_bytes() -> int:
    """Physical VMEM of the attached TPU; conservative (v7x-sized) fallback."""
    try:
        return int(pltpu.get_tpu_info().vmem_capacity_bytes)
    except Exception:
        return 64 << 20


def _residual_kernel(alpha_ref, x_ref, w_ref, b_ref, out_ref, *, h_valid):
    """One (TILE_N, H_pad) row tile: LayerNorm -> Linear sublayer -> residual add.

    alpha_ref : SMEM (1,) f32      LayerNorm alpha (scalar)
    x_ref     : VMEM (TILE_N, H_pad)  residual input tile
    w_ref     : VMEM (H_pad, H_pad)   sublayer weight (bf16, resident, single-buffered)
    b_ref     : VMEM (1, H_pad) f32   effective bias = beta * w.sum(0) + b (resident)
    out_ref   : VMEM (TILE_N, H_pad)
    """
    x = x_ref[...].astype(jnp.float32)
    h_pad = x.shape[-1]

    # Padded lanes of x are zero in HBM, so the sum is exact.
    mean = jnp.sum(x, axis=-1, keepdims=True) * (1.0 / h_valid)
    diff = x - mean

    ssq = jnp.sum(diff * diff, axis=-1, keepdims=True)
    if h_pad != h_valid:
        # Each padded lane contributes (0 - mean)^2; remove analytically (no lane mask).
        ssq = ssq - float(h_pad - h_valid) * (mean * mean)

    # torch.std default is unbiased (ddof = 1); eps is added to std (matches the module).
    var = ssq * (1.0 / (h_valid - 1))
    std = jnp.sqrt(var)

    # EUP reciprocal (free slot); fold alpha into the scale. beta is folded into b_ref.
    inv = alpha_ref[0] * pl.reciprocal(std + EPS, approx=True)
    normed = diff * inv

    # Sublayer Linear(H -> H): bf16 operands on the MXU, f32 accumulation.
    # Padded rows of w are zero, so padded lanes of `normed` contribute nothing.
    y = jnp.dot(normed.astype(jnp.bfloat16), w_ref[...],
                preferred_element_type=jnp.float32) + b_ref[...]

    # Dropout in eval mode is identity -> residual add.
    out_ref[...] = (x + y).astype(out_ref.dtype)


def _choose_tile_n(n_rows: int, h_pad: int, itemsize: int, vmem_cap: int) -> int:
    budget = max(vmem_cap - (16 << 20), 16 << 20)   # leave compiler headroom
    w_bytes = h_pad * h_pad * 2                     # single-buffered resident bf16 weight
    b_bytes = h_pad * 4                             # single-buffered bias
    per_row = 2 * 2 * h_pad * itemsize              # double-buffered x tile + out tile
    avail = budget - w_bytes - b_bytes
    if avail < per_row * 8:
        t = 8
    else:
        t = min(2048, avail // per_row)
    t = min(t, _round_up(n_rows, 8))
    if t >= 256 and n_rows >= 256:
        t = (t // 256) * 256                        # align M to the 256-wide MXU (v6e/v7x)
    return max(8, (t // 8) * 8)


def prepare_sublayer_params(w, b, alpha, beta):
    """One-time parameter prep (cache the result; do NOT re-run per forward call).

    Returns (w_p, b_eff, alpha_f32):
      w_p   : (h_pad, h_pad) bf16, zero-padded weight
      b_eff : (1, h_pad) f32, beta folded in: b_eff = beta * w.sum(axis=0) + b
      alpha : (1,) f32
    """
    H = w.shape[0]
    h_pad = _round_up(H, 128)
    w_f32 = w.astype(jnp.float32)
    b_eff = (beta.astype(jnp.float32)[0] * jnp.sum(w_f32, axis=0)
             + b.astype(jnp.float32)).reshape(1, H)
    w_p = w.astype(jnp.bfloat16)
    if h_pad != H:
        w_p = jnp.pad(w_p, ((0, h_pad - H), (0, h_pad - H)))
        b_eff = jnp.pad(b_eff, ((0, 0), (0, h_pad - H)))
    return w_p, b_eff, alpha.astype(jnp.float32)


def residual_connection(x, w_p, b_eff, alpha):
    """out = x + Linear(LayerNorm(x)).   x: (B, S, H); w_p/b_eff/alpha from prepare_sublayer_params."""
    B, S, H = x.shape
    assert H >= 2, "unbiased std (ddof=1) needs H >= 2"
    h_pad = w_p.shape[0]
    assert w_p.shape == (h_pad, h_pad) and h_pad == _round_up(H, 128)
    assert b_eff.shape == (1, h_pad)

    N = B * S
    itemsize = jnp.dtype(x.dtype).itemsize
    vmem_cap = _vmem_capacity_bytes()

    w_bytes = h_pad * h_pad * 2
    assert w_bytes + (8 << 20) < vmem_cap, (
        "resident-weight path needs the bf16 weight to fit VMEM; see TODO for column tiling")

    tile_n = _choose_tile_n(N, h_pad, itemsize, vmem_cap)
    n_pad = _round_up(N, tile_n)

    x2 = x.reshape(N, H)
    needs_pad = (n_pad, h_pad) != (N, H)
    if needs_pad:  # pad only when necessary; it is an extra HBM pass otherwise
        x2 = jnp.pad(x2, ((0, n_pad - N), (0, h_pad - H)))

    grid = (n_pad // tile_n,)
    vmem_need = (2 * 2 * tile_n * h_pad * itemsize   # double-buffered x + out tiles
                 + w_bytes + h_pad * 4               # single-buffered weight + bias
                 + (4 << 20))                        # slack for compiler scratch
    vmem_limit = int(min(max(vmem_need, 32 << 20), vmem_cap - (8 << 20)))

    out = pl.pallas_call(
        functools.partial(_residual_kernel, h_valid=H),
        out_shape=jax.ShapeDtypeStruct((n_pad, h_pad), x.dtype),
        grid=grid,
        in_specs=[
            pl.BlockSpec(memory_space=pltpu.MemorySpace.SMEM),          # alpha (scalar)
            pl.BlockSpec((tile_n, h_pad), lambda i: (i, 0)),            # x row tile
            pl.BlockSpec((h_pad, h_pad), lambda i: (0, 0),
                         pipeline_mode=pl.Buffered(buffer_count=1)),    # resident weight
            pl.BlockSpec((1, h_pad), lambda i: (0, 0),
                         pipeline_mode=pl.Buffered(buffer_count=1)),    # resident bias
        ],
        out_specs=pl.BlockSpec((tile_n, h_pad), lambda i: (i, 0)),
        compiler_params=pltpu.CompilerParams(
            dimension_semantics=("parallel",),
            vmem_limit_bytes=vmem_limit),
    )(alpha, x2, w_p, b_eff)

    if needs_pad:
        out = out[:N, :H]
    return out.reshape(B, S, H)


def _reference(x, w, b, alpha, beta):
    x = x.astype(jnp.float32)
    mean = jnp.mean(x, axis=-1, keepdims=True)
    std = jnp.std(x, axis=-1, keepdims=True, ddof=1)
    normed = alpha[0] * (x - mean) / (std + EPS) + beta[0]
    y = jnp.einsum("bsh,hk->bsk", normed, w.astype(jnp.float32)) + b
    return x + y


if __name__ == "__main__":
    key = jax.random.PRNGKey(0)
    kx, kw, kb = jax.random.split(key, 3)

    B, S, H = 2, 8, 32
    x = jax.random.normal(kx, (B, S, H), dtype=jnp.float32)

    # Synthetic sublayer (FeedForward-style Linear(H -> H)) + LayerNorm params.
    w = jax.random.normal(kw, (H, H), dtype=jnp.float32) * (1.0 / jnp.sqrt(H))
    b = jax.random.normal(kb, (H,), dtype=jnp.float32) * 0.01
    alpha = jnp.ones((1,), dtype=jnp.float32)        # LayerNormalization.alpha
    beta = jnp.full((1,), 0.1, dtype=jnp.float32)    # nonzero to exercise the beta fold

    # One-time parameter prep (hoisted out of the per-call path).
    w_p, b_eff, alpha_p = prepare_sublayer_params(w, b, alpha, beta)

    out = residual_connection(x, w_p, b_eff, alpha_p)
    jax.block_until_ready(out)

    ref = _reference(x, w, b, alpha, beta)
    assert out.shape == (B, S, H)
    # bf16 MXU operands + approx EUP reciprocal vs the f32 reference -> loosened tolerance.
    assert jnp.allclose(out, ref, atol=2e-2, rtol=2e-2), "mismatch vs reference"

    print("KERNEL_OK")
</pallas_src>

<mosaic_0001>
module attributes {stable_mosaic.version = 11 : i64} {
  func.func @_residual_kernel(%arg0: i32, %arg1: memref<1xf32, #tpu.memory_space<smem>>, %arg2: memref<16x128xf32, #tpu.memory_space<vmem>>, %arg3: memref<128x128xbf16, #tpu.memory_space<vmem>>, %arg4: memref<1x128xf32, #tpu.memory_space<vmem>>, %arg5: memref<16x128xf32, #tpu.memory_space<vmem>>) attributes {dimension_semantics = [#tpu.dimension_semantics<parallel>], iteration_bounds = array<i64: 1>, scalar_prefetch = 0 : i64, scratch_operands = 0 : i64, tpu.core_type = #tpu.core_type<tc>, window_params = [{transform_indices = @transform_0, window_bounds = array<i64: 1>}, {transform_indices = @transform_1, window_bounds = array<i64: 16, 128>}, {pipeline_mode = #tpu.pipeline_mode<synchronous>, transform_indices = @transform_2, window_bounds = array<i64: 128, 128>}, {pipeline_mode = #tpu.pipeline_mode<synchronous>, transform_indices = @transform_3, window_bounds = array<i64: 1, 128>}, {transform_indices = @transform_4, window_bounds = array<i64: 16, 128>}]} {
    %c0 = arith.constant 0 : index
    %c0_0 = arith.constant 0 : index
    %0 = vector.load %arg2[%c0, %c0_0] : memref<16x128xf32, #tpu.memory_space<vmem>>, vector<16x128xf32>
    %cst = arith.constant dense<0.000000e+00> : vector<16xf32>
    %1 = vector.multi_reduction <add>, %0, %cst [1] : vector<16x128xf32> to vector<16xf32>
    %2 = vector.shape_cast %1 : vector<16xf32> to vector<16x1xf32>
    %cst_1 = arith.constant 3.125000e-02 : f32
    %3 = vector.broadcast %cst_1 : f32 to vector<16x1xf32>
    %4 = arith.mulf %2, %3 : vector<16x1xf32>
    %5 = vector.broadcast %4 : vector<16x1xf32> to vector<16x128xf32>
    %6 = arith.subf %0, %5 : vector<16x128xf32>
    %7 = arith.mulf %6, %6 : vector<16x128xf32>
    %cst_2 = arith.constant dense<0.000000e+00> : vector<16xf32>
    %8 = vector.multi_reduction <add>, %7, %cst_2 [1] : vector<16x128xf32> to vector<16xf32>
    %9 = vector.shape_cast %8 : vector<16xf32> to vector<16x1xf32>
    %10 = arith.mulf %4, %4 : vector<16x1xf32>
    %cst_3 = arith.constant 9.600000e+01 : f32
    %11 = vector.broadcast %cst_3 : f32 to vector<16x1xf32>
    %12 = arith.mulf %11, %10 : vector<16x1xf32>
    %13 = arith.subf %9, %12 : vector<16x1xf32>
    %cst_4 = arith.constant 0.0322580636 : f32
    %14 = vector.broadcast %cst_4 : f32 to vector<16x1xf32>
    %15 = arith.mulf %13, %14 : vector<16x1xf32>
    %16 = math.sqrt %15 : vector<16x1xf32>
    %c0_5 = arith.constant 0 : index
    %17 = memref.load %arg1[%c0_5] : memref<1xf32, #tpu.memory_space<smem>>
    %cst_6 = arith.constant 9.99999997E-7 : f32
    %18 = vector.broadcast %cst_6 : f32 to vector<16x1xf32>
    %19 = arith.addf %16, %18 : vector<16x1xf32>
    %20 = tpu.reciprocal %19 {approx = true} : vector<16x1xf32> -> vector<16x1xf32>
    %21 = vector.broadcast %17 : f32 to vector<16x1xf32>
    %22 = arith.mulf %21, %20 : vector<16x1xf32>
    %23 = vector.broadcast %22 : vector<16x1xf32> to vector<16x128xf32>
    %24 = arith.mulf %6, %23 : vector<16x128xf32>
    %25 = arith.truncf %24 : vector<16x128xf32> to vector<16x128xbf16>
    %c0_7 = arith.constant 0 : index
    %c0_8 = arith.constant 0 : index
    %26 = vector.load %arg3[%c0_7, %c0_8] : memref<128x128xbf16, #tpu.memory_space<vmem>>, vector<128x128xbf16>
    %cst_9 = arith.constant dense<0.000000e+00> : vector<16x128xf32>
    %27 = tpu.matmul %25, %26, %cst_9 {dimension_numbers = #tpu.dot_dimension_numbers<[1], [0], [0], [1], [0, 0, 1, 1], [], []>} : vector<16x128xbf16>, vector<128x128xbf16>, vector<16x128xf32> -> vector<16x128xf32>
    %c0_10 = arith.constant 0 : index
    %c0_11 = arith.constant 0 : index
    %28 = vector.load %arg4[%c0_10, %c0_11] : memref<1x128xf32, #tpu.memory_space<vmem>>, vector<1x128xf32>
    %29 = vector.broadcast %28 : vector<1x128xf32> to vector<16x128xf32>
    %30 = arith.addf %27, %29 : vector<16x128xf32>
    %31 = arith.addf %0, %30 : vector<16x128xf32>
    %c0_12 = arith.constant 0 : index
    %c0_13 = arith.constant 0 : index
    %32 = vector.load %arg5[%c0_12, %c0_13] : memref<16x128xf32, #tpu.memory_space<vmem>>, vector<16x128xf32>
    tpu.vector_store %arg5[%c0_12, %c0_13], %31 {strides = array<i32>} : memref<16x128xf32, #tpu.memory_space<vmem>>, vector<16x128xf32>,
    return
  }
  func.func @transform_0(%arg0: i32) -> i32 {
    %c0_i32 = arith.constant 0 : i32
    %c0_i32_0 = arith.constant 0 : i32
    return %c0_i32 : i32
  }
  func.func @transform_1(%arg0: i32) -> (i32, i32) {
    %c0_i32 = arith.constant 0 : i32
    %c0_i32_0 = arith.constant 0 : i32
    return %arg0, %c0_i32 : i32, i32
  }
  func.func @transform_2(%arg0: i32) -> (i32, i32) {
    %c0_i32 = arith.constant 0 : i32
    %c0_i32_0 = arith.constant 0 : i32
    %c0_i32_1 = arith.constant 0 : i32
    return %c0_i32, %c0_i32_0 : i32, i32
  }
  func.func @transform_3(%arg0: i32) -> (i32, i32) {
    %c0_i32 = arith.constant 0 : i32
    %c0_i32_0 = arith.constant 0 : i32
    %c0_i32_1 = arith.constant 0 : i32
    return %c0_i32, %c0_i32_0 : i32, i32
  }
  func.func @transform_4(%arg0: i32) -> (i32, i32) {
    %c0_i32 = arith.constant 0 : i32
    %c0_i32_0 = arith.constant 0 : i32
    return %arg0, %c0_i32 : i32, i32
  }
}

</mosaic_0001>

<llo_original>
// kernel: tpu_custom_call.1
$region0: #{tpu_custom_call.1}
  #allocation0 [shape = 'u32[]', space=smem, size = 0x4, offset = 0x4, fixed_abs, tag = 'smem constant byte address 0x4 - core index']
  #allocation1 [shape = 'u32[72,128]{1,0:T(1,128)}', space=vmem, size = 0x9000, scoped, tag = 'internal scratch']
  #allocation2 [shape = 'f32[1]{0:T(128)S(6)}', space=smem, size = 0x200, scoped, tag = 'scoped memory for tpu_custom_call.1']
  %s0 = inlined_call_operand.<no memory space> [shape: f32[1], index: 0, kind: input, shape index: {}]
  %s1 = inlined_call_operand.hbm [shape: f32[16,128], index: 1, kind: input, shape index: {}]
  %s2 = inlined_call_operand.hbm [shape: bf16[128,128], index: 2, kind: input, shape index: {}]
  %s3 = inlined_call_operand.vmem [shape: f32[1,128], index: 3, kind: input, shape index: {}]
  %s4 = inlined_call_operand.hbm [shape: f32[16,128], index: 4, kind: output, shape index: {}]
  %s5 = sld [smem:[#allocation0]]
  $region34: #{tpu_custom_call.1} parent=0
    _
  %s7 = ssub.s32 1, %s5
  %s8 = scalar_select 0, %s7, %s5
  %9 = sst [smem:[#allocation2]] %s0
  $region1: #{tpu_custom_call.1} parent=0
    #allocation3 [shape = 'u8[8192]{0}', space=vmem, size = 0x2000, scoped, tag = 'input window, operand 1, single buffered']
    #allocation4 [shape = 's32[1]{0}', space=sflag, size = 0x4, scoped, tag = 'scoped memory for tpu_custom_call.1']
    #allocation5 [shape = 's32[1]{0}', space=sflag, size = 0x4, scoped, tag = 'scoped memory for tpu_custom_call.1']
    #allocation6 [shape = 'u8[32768]{0}', space=vmem, size = 0x8000, scoped, tag = 'input window, operand 2, single buffered']
    #allocation7 [shape = 's32[1]{0}', space=sflag, size = 0x4, scoped, tag = 'scoped memory for tpu_custom_call.1']
    #allocation8 [shape = 'u8[8192]{0}', space=vmem, size = 0x2000, scoped, tag = 'output window, operand 0, single buffered']
    %10 = vsyncpa [#allocation4], 0
    %11 = vsyncpa [#allocation7], 0
    %12 = vsyncpa [#allocation5], 0
    // Predicated region
    $region2: #{tpu_custom_call.1} parent=1 // pred_check
      _
    $region3: #{tpu_custom_call.1} parent=1 // pred_check_branch
      %14 = sbr.rel (0) target = $region5
    $region4: #{tpu_custom_call.1} parent=1 // pred_region
      _
    $region5: #{tpu_custom_call.1} parent=1 // pred_fallthru
      _
    // Predicated region
    $region6: #{tpu_custom_call.1} parent=1 // pred_check
      _
    $region7: #{tpu_custom_call.1} parent=1 // pred_check_branch
      %16 = sbr.rel (0) target = $region9
    $region8: #{tpu_custom_call.1} parent=1 // pred_region
      %18 = vsyncadd [#allocation4], 0
      %s19 = sshll.u32 %s1, 4
      %s20 = int_to_ptr.hbm [resolvable:$true] %s19
      %s21 = sshll.u32 [#allocation3], 4
      %s22 = int_to_ptr.vmem [resolvable:$true] %s21
      %27 = dma.hbm_to_vmem [thread:$0]  %s20, 256, %s22, [#allocation4], 128, 128, 8
    $region9: #{tpu_custom_call.1} parent=1 // pred_fallthru
      _
    // Predicated region
    $region10: #{tpu_custom_call.1} parent=1 // pred_check
      _
    $region11: #{tpu_custom_call.1} parent=1 // pred_check_branch
      %29 = sbr.rel (0) target = $region13
    $region12: #{tpu_custom_call.1} parent=1 // pred_region
      %31 = vsyncadd [#allocation7], 0
      %s32 = sshll.u32 %s2, 4
      %s33 = int_to_ptr.hbm [resolvable:$true] %s32
      %s34 = sshll.u32 [#allocation6], 4
      %s35 = int_to_ptr.vmem [resolvable:$true] %s34
      %40 = dma.hbm_to_vmem [thread:$0]  %s33, 1024, %s35, [#allocation7], 64, 64, 4
    $region13: #{tpu_custom_call.1} parent=1 // pred_fallthru
      _
    // Predicated region
    $region14: #{tpu_custom_call.1} parent=1 // pred_check
      _
    $region15: #{tpu_custom_call.1} parent=1 // pred_check_branch
      %42 = sbr.rel (0) target = $region17
    $region16: #{tpu_custom_call.1} parent=1 // pred_region
      _
    $region17: #{tpu_custom_call.1} parent=1 // pred_fallthru
      _
    // Predicated region
    $region18: #{tpu_custom_call.1} parent=1 // pred_check
      _
    $region19: #{tpu_custom_call.1} parent=1 // pred_check_branch
      %44 = sbr.rel (0) target = $region21
    $region20: #{tpu_custom_call.1} parent=1 // pred_region
      %46 = dma.done [#allocation4], 256
    $region21: #{tpu_custom_call.1} parent=1 // pred_fallthru
      _
    // Predicated region
    $region22: #{tpu_custom_call.1} parent=1 // pred_check
      _
    $region23: #{tpu_custom_call.1} parent=1 // pred_check_branch
      %48 = sbr.rel (0) target = $region25
    $region24: #{tpu_custom_call.1} parent=1 // pred_region
      %50 = dma.done [#allocation7], 1024
    $region25: #{tpu_custom_call.1} parent=1 // pred_fallthru
      _
    %v51 = vld [vmem:[#allocation3] sm:$0xff]
    %v52 = vld [vmem:[#allocation3 + $0x8] sm:$0xff]
    %53 = vadd.xlane.f32.xlu0 %v51
    %v54 = vpop.xlane.xlu0 %53
    %55 = vadd.xlane.f32.xlu0 %v52
    %v56 = vpop.xlane.xlu0 %55
    %v57 = vmul.f32 %v54, 0.03125
    %v58 = vmul.f32 %v56, 0.03125
    %v59 = vsub.f32 %v51, %v57
    %v60 = vsub.f32 %v52, %v58
    %v61 = vmul.f32 %v59, %v59
    %v62 = vmul.f32 %v60, %v60
    %63 = vadd.xlane.f32.xlu0 %v61
    %v64 = vpop.xlane.xlu0 %63
    %65 = vadd.xlane.f32.xlu0 %v62
    %v66 = vpop.xlane.xlu0 %65
    %v67 = vmul.f32 %v57, %v57
    %v68 = vmul.f32 %v58, %v58
    %v69 = vmul.f32 %v67, 96.0
    %v70 = vmul.f32 %v68, 96.0
    %v71 = vsub.f32 %v64, %v69
    %v72 = vsub.f32 %v66, %v70
    %v73 = vmul.f32 %v71, 0.032258064
    %v74 = vmul.f32 %v72, 0.032258064
    %v75 = vrsqrt.pop %v73
    %v76 = vmul.f32 %v75, %v73
    %v77 = vmul.f32 %v76, %v75
    %v78 = vmul.f32 0.5, %v77
    %v79 = vsub.f32 1.5, %v78
    %v80 = vmul.f32 %v75, %v79
    %v81 = vmul.f32 %v73, %v80
    %vm82 = vcmp.eq.f32.partialorder %v73, inf
    %v83 = vsel %vm82, %v73, %v81
    %vm84 = vcmp.eq.f32.partialorder %v73, 0.0
    %v85 = vand.u32 %v73, 2147483648
    %v86 = vsel %vm84, %v85, %v83
    %v87 = vrsqrt.pop %v74
    %v88 = vmul.f32 %v87, %v74
    %v89 = vmul.f32 %v88, %v87
    %v90 = vmul.f32 0.5, %v89
    %v91 = vsub.f32 1.5, %v90
    %v92 = vmul.f32 %v87, %v91
    %v93 = vmul.f32 %v74, %v92
    %vm94 = vcmp.eq.f32.partialorder %v74, inf
    %v95 = vsel %vm94, %v74, %v93
    %vm96 = vcmp.eq.f32.partialorder %v74, 0.0
    %v97 = vand.u32 %v74, 2147483648
    %v98 = vsel %vm96, %v97, %v95
    %s99 = sld [smem:[#allocation2]]
    %v100 = vadd.f32 %v86, 1e-06
    %v101 = vadd.f32 %v98, 1e-06
    %v102 = vrcp.pop %v100
    %v103 = vrcp.pop %v101
    %v104 = vstv %s99
    %v105 = vmul.f32 %v104, %v102
    %v106 = vmul.f32 %v104, %v103
    %v107 = vmul.f32 %v59, %v105
    %v108 = vmul.f32 %v60, %v106
    %v109 = vpack.c.bf16 %v108, %v107
    %v110 = vld [vmem:[#allocation6] sm:$0xf]
    %v111 = vld [vmem:[#allocation6 + $0x4] sm:$0xf]
    %v112 = vld [vmem:[#allocation6 + $0x8] sm:$0xf]
    %v113 = vld [vmem:[#allocation6 + $0xc] sm:$0xf]
    %v114 = vld [vmem:[#allocation6 + $0x10] sm:$0xf]
    %v115 = vld [vmem:[#allocation6 + $0x14] sm:$0xf]
    %v116 = vld [vmem:[#allocation6 + $0x18] sm:$0xf]
    %v117 = vld [vmem:[#allocation6 + $0x1c] sm:$0xf]
    %v118 = vld [vmem:[#allocation6 + $0x20] sm:$0xf]
    %v119 = vld [vmem:[#allocation6 + $0x24] sm:$0xf]
    %v120 = vld [vmem:[#allocation6 + $0x28] sm:$0xf]
    %v121 = vld [vmem:[#allocation6 + $0x2c] sm:$0xf]
    %v122 = vld [vmem:[#allocation6 + $0x30] sm:$0xf]
    %v123 = vld [vmem:[#allocation6 + $0x34] sm:$0xf]
    %v124 = vld [vmem:[#allocation6 + $0x38] sm:$0xf]
    %v125 = vld [vmem:[#allocation6 + $0x3c] sm:$0xf]
    %v126 = vld [vmem:[%s3] sm:$0x1]
    %v128 = vperm.slane %v126, 0
    %v146 = vunpack.c.l.b16 %v110
    %v147 = vunpack.c.l.b16 %v111
    %v148 = vunpack.c.l.b16 %v112
    %v149 = vunpack.c.l.b16 %v113
    %v150 = vunpack.c.l.b16 %v114
    %v151 = vunpack.c.l.b16 %v115
    %v152 = vunpack.c.l.b16 %v116
    %v153 = vunpack.c.l.b16 %v117
    %v154 = vunpack.c.l.b16 %v118
    %v155 = vunpack.c.l.b16 %v119
    %v156 = vunpack.c.l.b16 %v120
    %v157 = vunpack.c.l.b16 %v121
    %v158 = vunpack.c.l.b16 %v122
    %v159 = vunpack.c.l.b16 %v123
    %v160 = vunpack.c.l.b16 %v124
    %v161 = vunpack.c.l.b16 %v125
    %v162 = vpack.c.b16 %v147, %v146
    %v163 = vpack.c.b16 %v149, %v148
    %v164 = vpack.c.b16 %v151, %v150
    %v165 = vpack.c.b16 %v153, %v152
    %v166 = vpack.c.b16 %v155, %v154
    %v167 = vpack.c.b16 %v157, %v156
    %v168 = vpack.c.b16 %v159, %v158
    %v169 = vpack.c.b16 %v161, %v160
    %178 = vmatpush.bf16.msra.mxu0 %v169
    %179 = vmatpush.bf16.msra.mxu0 %v168
    %180 = vmatpush.bf16.msra.mxu0 %v167
    %181 = vmatpush.bf16.msra.mxu0 %v166
    %182 = vmatpush.bf16.msra.mxu0 %v165
    %183 = vmatpush.bf16.msra.mxu0 %v164
    %184 = vmatpush.bf16.msra.mxu0 %v163
    %185 = vmatpush.bf16.msra.mxu0 %v162
    %186 = vmatmul.bf16.gmra.mxu0 %v109
    %v187 = vpop.f32.mrf.mxu0
    %v188 = vadd.f32 %v128, %v187
    %v189 = vpop.f32.mrf.mxu0
    %v190 = vadd.f32 %v128, %v189
    %191 = vdwg.mxu0
    %v192 = vadd.f32 %v51, %v188
    %v193 = vadd.f32 %v52, %v190
    %194 = vst [vmem:[#allocation8] sm:$0xff] %v192
    %195 = vst [vmem:[#allocation8 + $0x8] sm:$0xff] %v193
    // Predicated region
    $region26: #{tpu_custom_call.1} parent=1 // pred_check
      _
    $region27: #{tpu_custom_call.1} parent=1 // pred_check_branch
      %197 = sbr.rel (0) target = $region29
    $region28: #{tpu_custom_call.1} parent=1 // pred_region
      %199 = vsyncadd [#allocation5], 0
      %s200 = sshll.u32 [#allocation8], 4
      %s201 = int_to_ptr.vmem [resolvable:$true] %s200
      %s202 = sshll.u32 %s4, 4
      %s203 = int_to_ptr.hbm [resolvable:$true] %s202
      %208 = dma.vmem_to_hbm [thread:$0]  %s201, 256, %s203, [#allocation5], 128, 128, 8
    $region29: #{tpu_custom_call.1} parent=1 // pred_fallthru
      _
    // Predicated region
    $region30: #{tpu_custom_call.1} parent=1 // pred_check
      _
    $region31: #{tpu_custom_call.1} parent=1 // pred_check_branch
      %210 = sbr.rel (0) target = $region33
    $region32: #{tpu_custom_call.1} parent=1 // pred_region
      %212 = dma.done [#allocation5], 256
    $region33: #{tpu_custom_call.1} parent=1 // pred_fallthru
      _
    %213 = vsyncpa [#allocation4], 1
    %214 = vsyncpa [#allocation7], 1
    %215 = vsyncpa [#allocation5], 1

</llo_original>
